<compile_context>
chip_gen: v5e
topology: v5e:2x2
jax: 0.10.0
libtpu: 0.0.40
codegen_flags: <defaults>
</compile_context>

<pallas_src>
import functools

import jax
import jax.numpy as jnp
from jax.experimental import pallas as pl
from jax.experimental.pallas import tpu as pltpu


def _cdiv(a: int, b: int) -> int:
    return (a + b - 1) // b


def _round_up(a: int, b: int) -> int:
    return _cdiv(a, b) * b


def _gate_kernel(x_ref, w_ref, w_out_ref, idx_out_ref, *, topk, score_func,
                 route_scale, chunk):
    # x_ref      : VMEM (tile, dim)   token tile (tokens on sublanes for the matmul)
    # w_ref      : VMEM (E, dim)      gate weight, VMEM-resident (revisited block)
    # w_out_ref  : VMEM (topk, tile)  routing weights, tokens on lanes (dense stores)
    # idx_out_ref: VMEM (topk, tile)  selected expert indices (int32)
    tile = x_ref.shape[0]
    n_experts = w_ref.shape[0]
    w = w_ref[...]                                     # load once, reused by chunks

    # Vector stage processed in <=256-token chunks so the live set
    # (scores + iota + accumulators) stays well under the 64-vreg file.
    for c in range(tile // chunk):                     # static unroll (<= 2 chunks)
        x_c = x_ref[c * chunk:(c + 1) * chunk, :]      # (chunk, dim)

        # MXU: contract `dim` of (E, dim) and (chunk, dim) -> scores in (E, T)
        # orientation (experts on sublanes, tokens on lanes), f32 accumulation.
        s = jax.lax.dot_general(
            w, x_c, (((1,), (1,)), ((), ())),
            preferred_element_type=jnp.float32)        # (E, chunk) f32

        if score_func == "softmax":
            m = jnp.max(s, axis=0, keepdims=True)      # (1, chunk) sublane-axis max
            e = jnp.exp(s - m)                         # EUP
            sum_e = jnp.sum(e, axis=0, keepdims=True)  # (1, chunk)
            work = e           # select on unnormalized exp (same ordering as probs)
        else:  # "sigmoid"
            work = jax.nn.sigmoid(s)
            sum_e = None

        # TODO(synk): the bias path (only active when dim == 7168) and the
        # n_expert_groups > 1 group-limited routing path are not exercised by the
        # default ModelArgs and are not implemented here.

        row = jax.lax.broadcasted_iota(jnp.int32, (n_experts, chunk), 0)
        out_row = jax.lax.broadcasted_iota(jnp.int32, (topk, chunk), 0)

        w_acc = jnp.zeros((topk, chunk), jnp.float32)
        i_acc = jnp.zeros((topk, chunk), jnp.int32)
        for k in range(topk):                          # static unroll, topk tiny (6)
            vmax = jnp.max(work, axis=0, keepdims=True)                  # (1, chunk)
            hit = work == vmax
            idx = jnp.min(jnp.where(hit, row, n_experts), axis=0,
                          keepdims=True)               # first (lowest-index) max
            w_acc = jnp.where(out_row == k, vmax, w_acc)
            i_acc = jnp.where(out_row == k, idx, i_acc)
            work = jnp.where(row == idx, -1.0, work)   # knock out winner (work > 0)

        if score_func == "softmax":
            # Deferred normalization: topk-wide multiply by an EUP reciprocal.
            # One Newton step keeps ~f32 accuracy; still far cheaper than a
            # 64-wide divide per token.
            inv = pl.reciprocal(sum_e, approx=True)
            inv = inv * (2.0 - sum_e * inv)
            w_acc = w_acc * inv
        else:
            w_acc = w_acc / jnp.sum(w_acc, axis=0, keepdims=True)
        if route_scale != 1.0:
            w_acc = w_acc * route_scale

        w_out_ref[:, c * chunk:(c + 1) * chunk] = w_acc.astype(w_out_ref.dtype)
        idx_out_ref[:, c * chunk:(c + 1) * chunk] = i_acc


def gate_forward(x, weight, *, topk=6, score_func="softmax", route_scale=1.0,
                 tok_tile=512):
    """Pallas equivalent of Gate.forward (default-args path).

    x      : (n_tokens, dim)           -- bf16 recommended (ModelArgs dtype="bf16")
    weight : (n_routed_experts, dim)
    returns (weights (n_tokens, topk) in x.dtype, indices (n_tokens, topk) int32)
    """
    n_tokens, dim = x.shape
    n_experts, wdim = weight.shape
    assert wdim == dim

    # Feed the MXU in x's dtype (bf16 halves x's HBM traffic and hits the native
    # bf16 MXU path; accumulation is f32 either way).
    weight = weight.astype(x.dtype)

    # Token axis lands on lanes inside the kernel and in the outputs -> keep it
    # 128-aligned. Prefer >=2 grid steps when there is enough work so v7x can
    # shard the "parallel" token axis across both TensorCores.
    n_lane = _round_up(max(n_tokens, 1), 128)
    tile = min(tok_tile, n_lane)
    if n_lane <= tok_tile and n_lane >= 2 * 128:
        tile = _round_up(_cdiv(n_lane, 2), 128)
    n_pad = _round_up(n_lane, tile)
    chunk = 256 if tile % 256 == 0 else 128

    x_p = x if n_pad == n_tokens else jnp.pad(x, ((0, n_pad - n_tokens), (0, 0)))

    kernel = functools.partial(_gate_kernel, topk=topk, score_func=score_func,
                               route_scale=route_scale, chunk=chunk)

    # NOTE: the weight's block index is constant, so Pallas fetches it once and it
    # stays VMEM-resident across grid steps (no per-step re-DMA).
    w_et, idx_et = pl.pallas_call(
        kernel,
        out_shape=(
            jax.ShapeDtypeStruct((topk, n_pad), x.dtype),
            jax.ShapeDtypeStruct((topk, n_pad), jnp.int32),
        ),
        grid_spec=pltpu.PrefetchScalarGridSpec(
            num_scalar_prefetch=0,
            grid=(n_pad // tile,),
            in_specs=[
                pl.BlockSpec((tile, dim), lambda i: (i, 0)),       # token tile
                pl.BlockSpec((n_experts, dim), lambda i: (0, 0)),  # resident weight
            ],
            out_specs=(
                pl.BlockSpec((topk, tile), lambda i: (0, i)),      # lane-dense
                pl.BlockSpec((topk, tile), lambda i: (0, i)),      # lane-dense
            ),
        ),
        compiler_params=pltpu.CompilerParams(
            dimension_semantics=("parallel",)),   # token tiles are independent
    )(x_p, weight)

    # Cheap wrapper-side layout plumbing back to (n_tokens, topk).
    weights = w_et.T[:n_tokens]
    indices = idx_et.T[:n_tokens]
    return weights, indices


if __name__ == "__main__":
    # ModelArgs defaults relevant to Gate (dtype="bf16")
    dim = 128
    n_routed_experts = 64
    topk = 6            # n_activated_experts
    route_scale = 1.0
    batch, seq = 2, 8
    n_tokens = batch * seq

    key = jax.random.PRNGKey(0)
    k_w, k_x = jax.random.split(key)

    # deterministic synthetic weight (torch.empty is uninitialized; use scaled normal)
    weight = (jax.random.normal(k_w, (n_routed_experts, dim), jnp.float32)
              * (dim ** -0.5)).astype(jnp.bfloat16)
    x = jax.random.normal(k_x, (batch, seq, dim), jnp.float32).astype(
        jnp.bfloat16).reshape(n_tokens, dim)

    weights, indices = gate_forward(x, weight, topk=topk,
                                    score_func="softmax", route_scale=route_scale)
    weights = jax.block_until_ready(weights)
    indices = jax.block_until_ready(indices)

    # pure-JAX reference of Gate.forward (softmax / no bias / single group) on the
    # same bf16 inputs with f32 accumulation (matches the MXU path).
    scores_ref = jnp.dot(x.astype(jnp.float32), weight.astype(jnp.float32).T,
                         precision=jax.lax.Precision.HIGHEST)
    probs_ref = jax.nn.softmax(scores_ref, axis=-1)
    vals_ref, idx_ref = jax.lax.top_k(probs_ref, topk)
    weights_ref = (vals_ref * route_scale).astype(x.dtype)

    assert weights.shape == (n_tokens, topk) and weights.dtype == x.dtype
    assert indices.shape == (n_tokens, topk) and indices.dtype == jnp.int32
    assert jnp.array_equal(indices, idx_ref), "expert index mismatch vs reference"
    assert jnp.allclose(weights.astype(jnp.float32), weights_ref.astype(jnp.float32),
                        atol=1e-3, rtol=2e-2), "routing weight mismatch vs reference"

    print("KERNEL_OK")
</pallas_src>

<mosaic_0001>
module attributes {stable_mosaic.version = 11 : i64} {
  func.func @_gate_kernel(%arg0: i32, %arg1: memref<128x128xbf16, #tpu.memory_space<vmem>>, %arg2: memref<64x128xbf16, #tpu.memory_space<vmem>>, %arg3: memref<6x128xbf16, #tpu.memory_space<vmem>>, %arg4: memref<6x128xi32, #tpu.memory_space<vmem>>) attributes {dimension_semantics = [#tpu.dimension_semantics<parallel>], iteration_bounds = array<i64: 1>, scalar_prefetch = 0 : i64, scratch_operands = 0 : i64, tpu.core_type = #tpu.core_type<tc>, window_params = [{transform_indices = @transform_0, window_bounds = array<i64: 128, 128>}, {pipeline_mode = #tpu.pipeline_mode<synchronous>, transform_indices = @transform_1, window_bounds = array<i64: 64, 128>}, {transform_indices = @transform_2, window_bounds = array<i64: 6, 128>}, {transform_indices = @transform_3, window_bounds = array<i64: 6, 128>}]} {
    %c0 = arith.constant 0 : index
    %c0_0 = arith.constant 0 : index
    %0 = vector.load %arg2[%c0, %c0_0] : memref<64x128xbf16, #tpu.memory_space<vmem>>, vector<64x128xbf16>
    %c0_1 = arith.constant 0 : index
    %c0_2 = arith.constant 0 : index
    %1 = vector.load %arg1[%c0_1, %c0_2] : memref<128x128xbf16, #tpu.memory_space<vmem>>, vector<128x128xbf16>
    %cst = arith.constant dense<0.000000e+00> : vector<64x128xf32>
    %2 = tpu.matmul %0, %1, %cst {dimension_numbers = #tpu.dot_dimension_numbers<[1], [1], [0], [0], [0, 0, 1, 0], [], []>} : vector<64x128xbf16>, vector<128x128xbf16>, vector<64x128xf32> -> vector<64x128xf32>
    %cst_3 = arith.constant dense<0xFF800000> : vector<128xf32>
    %3 = vector.multi_reduction <maximumf>, %2, %cst_3 [0] : vector<64x128xf32> to vector<128xf32>
    %4 = vector.shape_cast %3 : vector<128xf32> to vector<1x128xf32>
    %5 = vector.broadcast %4 : vector<1x128xf32> to vector<64x128xf32>
    %6 = arith.subf %2, %5 : vector<64x128xf32>
    %7 = math.exp %6 : vector<64x128xf32>
    %cst_4 = arith.constant dense<0.000000e+00> : vector<128xf32>
    %8 = vector.multi_reduction <add>, %7, %cst_4 [0] : vector<64x128xf32> to vector<128xf32>
    %9 = vector.shape_cast %8 : vector<128xf32> to vector<1x128xf32>
    %10 = tpu.iota {dimensions = array<i32: 0>} : vector<64x128xi32>
    %11 = tpu.iota {dimensions = array<i32: 0>} : vector<6x128xi32>
    %cst_5 = arith.constant 0.000000e+00 : f32
    %12 = vector.broadcast %cst_5 : f32 to vector<6x128xf32>
    %c0_i32 = arith.constant 0 : i32
    %13 = vector.broadcast %c0_i32 : i32 to vector<6x128xi32>
    %cst_6 = arith.constant dense<0xFF800000> : vector<128xf32>
    %14 = vector.multi_reduction <maximumf>, %7, %cst_6 [0] : vector<64x128xf32> to vector<128xf32>
    %15 = vector.shape_cast %14 : vector<128xf32> to vector<1x128xf32>
    %16 = vector.broadcast %15 : vector<1x128xf32> to vector<64x128xf32>
    %17 = arith.cmpf oeq, %7, %16 : vector<64x128xf32>
    %c64_i32 = arith.constant 64 : i32
    %18 = vector.broadcast %c64_i32 : i32 to vector<64x128xi32>
    %19 = arith.select %17, %10, %18 : vector<64x128xi1>, vector<64x128xi32>
    %cst_7 = arith.constant dense<2147483647> : vector<128xi32>
    %20 = vector.multi_reduction <minsi>, %19, %cst_7 [0] : vector<64x128xi32> to vector<128xi32>
    %21 = vector.shape_cast %20 : vector<128xi32> to vector<1x128xi32>
    %c0_i32_8 = arith.constant 0 : i32
    %22 = vector.broadcast %c0_i32_8 : i32 to vector<6x128xi32>
    %23 = arith.cmpi eq, %11, %22 : vector<6x128xi32>
    %24 = vector.shape_cast %15 : vector<1x128xf32> to vector<1x128xf32>
    %25 = vector.broadcast %24 : vector<1x128xf32> to vector<6x128xf32>
    %26 = arith.select %23, %25, %12 : vector<6x128xi1>, vector<6x128xf32>
    %c0_i32_9 = arith.constant 0 : i32
    %27 = vector.broadcast %c0_i32_9 : i32 to vector<6x128xi32>
    %28 = arith.cmpi eq, %11, %27 : vector<6x128xi32>
    %29 = vector.shape_cast %21 : vector<1x128xi32> to vector<1x128xi32>
    %30 = vector.broadcast %29 : vector<1x128xi32> to vector<6x128xi32>
    %31 = arith.select %28, %30, %13 : vector<6x128xi1>, vector<6x128xi32>
    %32 = vector.broadcast %21 : vector<1x128xi32> to vector<64x128xi32>
    %33 = arith.cmpi eq, %10, %32 : vector<64x128xi32>
    %cst_10 = arith.constant -1.000000e+00 : f32
    %34 = vector.broadcast %cst_10 : f32 to vector<64x128xf32>
    %35 = arith.select %33, %34, %7 : vector<64x128xi1>, vector<64x128xf32>
    %cst_11 = arith.constant dense<0xFF800000> : vector<128xf32>
    %36 = vector.multi_reduction <maximumf>, %35, %cst_11 [0] : vector<64x128xf32> to vector<128xf32>
    %37 = vector.shape_cast %36 : vector<128xf32> to vector<1x128xf32>
    %38 = vector.broadcast %37 : vector<1x128xf32> to vector<64x128xf32>
    %39 = arith.cmpf oeq, %35, %38 : vector<64x128xf32>
    %c64_i32_12 = arith.constant 64 : i32
    %40 = vector.broadcast %c64_i32_12 : i32 to vector<64x128xi32>
    %41 = arith.select %39, %10, %40 : vector<64x128xi1>, vector<64x128xi32>
    %cst_13 = arith.constant dense<2147483647> : vector<128xi32>
    %42 = vector.multi_reduction <minsi>, %41, %cst_13 [0] : vector<64x128xi32> to vector<128xi32>
    %43 = vector.shape_cast %42 : vector<128xi32> to vector<1x128xi32>
    %c1_i32 = arith.constant 1 : i32
    %44 = vector.broadcast %c1_i32 : i32 to vector<6x128xi32>
    %45 = arith.cmpi eq, %11, %44 : vector<6x128xi32>
    %46 = vector.shape_cast %37 : vector<1x128xf32> to vector<1x128xf32>
    %47 = vector.broadcast %46 : vector<1x128xf32> to vector<6x128xf32>
    %48 = arith.select %45, %47, %26 : vector<6x128xi1>, vector<6x128xf32>
    %c1_i32_14 = arith.constant 1 : i32
    %49 = vector.broadcast %c1_i32_14 : i32 to vector<6x128xi32>
    %50 = arith.cmpi eq, %11, %49 : vector<6x128xi32>
    %51 = vector.shape_cast %43 : vector<1x128xi32> to vector<1x128xi32>
    %52 = vector.broadcast %51 : vector<1x128xi32> to vector<6x128xi32>
    %53 = arith.select %50, %52, %31 : vector<6x128xi1>, vector<6x128xi32>
    %54 = vector.broadcast %43 : vector<1x128xi32> to vector<64x128xi32>
    %55 = arith.cmpi eq, %10, %54 : vector<64x128xi32>
    %cst_15 = arith.constant -1.000000e+00 : f32
    %56 = vector.broadcast %cst_15 : f32 to vector<64x128xf32>
    %57 = arith.select %55, %56, %35 : vector<64x128xi1>, vector<64x128xf32>
    %cst_16 = arith.constant dense<0xFF800000> : vector<128xf32>
    %58 = vector.multi_reduction <maximumf>, %57, %cst_16 [0] : vector<64x128xf32> to vector<128xf32>
    %59 = vector.shape_cast %58 : vector<128xf32> to vector<1x128xf32>
    %60 = vector.broadcast %59 : vector<1x128xf32> to vector<64x128xf32>
    %61 = arith.cmpf oeq, %57, %60 : vector<64x128xf32>
    %c64_i32_17 = arith.constant 64 : i32
    %62 = vector.broadcast %c64_i32_17 : i32 to vector<64x128xi32>
    %63 = arith.select %61, %10, %62 : vector<64x128xi1>, vector<64x128xi32>
    %cst_18 = arith.constant dense<2147483647> : vector<128xi32>
    %64 = vector.multi_reduction <minsi>, %63, %cst_18 [0] : vector<64x128xi32> to vector<128xi32>
    %65 = vector.shape_cast %64 : vector<128xi32> to vector<1x128xi32>
    %c2_i32 = arith.constant 2 : i32
    %66 = vector.broadcast %c2_i32 : i32 to vector<6x128xi32>
    %67 = arith.cmpi eq, %11, %66 : vector<6x128xi32>
    %68 = vector.shape_cast %59 : vector<1x128xf32> to vector<1x128xf32>
    %69 = vector.broadcast %68 : vector<1x128xf32> to vector<6x128xf32>
    %70 = arith.select %67, %69, %48 : vector<6x128xi1>, vector<6x128xf32>
    %c2_i32_19 = arith.constant 2 : i32
    %71 = vector.broadcast %c2_i32_19 : i32 to vector<6x128xi32>
    %72 = arith.cmpi eq, %11, %71 : vector<6x128xi32>
    %73 = vector.shape_cast %65 : vector<1x128xi32> to vector<1x128xi32>
    %74 = vector.broadcast %73 : vector<1x128xi32> to vector<6x128xi32>
    %75 = arith.select %72, %74, %53 : vector<6x128xi1>, vector<6x128xi32>
    %76 = vector.broadcast %65 : vector<1x128xi32> to vector<64x128xi32>
    %77 = arith.cmpi eq, %10, %76 : vector<64x128xi32>
    %cst_20 = arith.constant -1.000000e+00 : f32
    %78 = vector.broadcast %cst_20 : f32 to vector<64x128xf32>
    %79 = arith.select %77, %78, %57 : vector<64x128xi1>, vector<64x128xf32>
    %cst_21 = arith.constant dense<0xFF800000> : vector<128xf32>
    %80 = vector.multi_reduction <maximumf>, %79, %cst_21 [0] : vector<64x128xf32> to vector<128xf32>
    %81 = vector.shape_cast %80 : vector<128xf32> to vector<1x128xf32>
    %82 = vector.broadcast %81 : vector<1x128xf32> to vector<64x128xf32>
    %83 = arith.cmpf oeq, %79, %82 : vector<64x128xf32>
    %c64_i32_22 = arith.constant 64 : i32
    %84 = vector.broadcast %c64_i32_22 : i32 to vector<64x128xi32>
    %85 = arith.select %83, %10, %84 : vector<64x128xi1>, vector<64x128xi32>
    %cst_23 = arith.constant dense<2147483647> : vector<128xi32>
    %86 = vector.multi_reduction <minsi>, %85, %cst_23 [0] : vector<64x128xi32> to vector<128xi32>
    %87 = vector.shape_cast %86 : vector<128xi32> to vector<1x128xi32>
    %c3_i32 = arith.constant 3 : i32
    %88 = vector.broadcast %c3_i32 : i32 to vector<6x128xi32>
    %89 = arith.cmpi eq, %11, %88 : vector<6x128xi32>
    %90 = vector.shape_cast %81 : vector<1x128xf32> to vector<1x128xf32>
    %91 = vector.broadcast %90 : vector<1x128xf32> to vector<6x128xf32>
    %92 = arith.select %89, %91, %70 : vector<6x128xi1>, vector<6x128xf32>
    %c3_i32_24 = arith.constant 3 : i32
    %93 = vector.broadcast %c3_i32_24 : i32 to vector<6x128xi32>
    %94 = arith.cmpi eq, %11, %93 : vector<6x128xi32>
    %95 = vector.shape_cast %87 : vector<1x128xi32> to vector<1x128xi32>
    %96 = vector.broadcast %95 : vector<1x128xi32> to vector<6x128xi32>
    %97 = arith.select %94, %96, %75 : vector<6x128xi1>, vector<6x128xi32>
    %98 = vector.broadcast %87 : vector<1x128xi32> to vector<64x128xi32>
    %99 = arith.cmpi eq, %10, %98 : vector<64x128xi32>
    %cst_25 = arith.constant -1.000000e+00 : f32
    %100 = vector.broadcast %cst_25 : f32 to vector<64x128xf32>
    %101 = arith.select %99, %100, %79 : vector<64x128xi1>, vector<64x128xf32>
    %cst_26 = arith.constant dense<0xFF800000> : vector<128xf32>
    %102 = vector.multi_reduction <maximumf>, %101, %cst_26 [0] : vector<64x128xf32> to vector<128xf32>
    %103 = vector.shape_cast %102 : vector<128xf32> to vector<1x128xf32>
    %104 = vector.broadcast %103 : vector<1x128xf32> to vector<64x128xf32>
    %105 = arith.cmpf oeq, %101, %104 : vector<64x128xf32>
    %c64_i32_27 = arith.constant 64 : i32
    %106 = vector.broadcast %c64_i32_27 : i32 to vector<64x128xi32>
    %107 = arith.select %105, %10, %106 : vector<64x128xi1>, vector<64x128xi32>
    %cst_28 = arith.constant dense<2147483647> : vector<128xi32>
    %108 = vector.multi_reduction <minsi>, %107, %cst_28 [0] : vector<64x128xi32> to vector<128xi32>
    %109 = vector.shape_cast %108 : vector<128xi32> to vector<1x128xi32>
    %c4_i32 = arith.constant 4 : i32
    %110 = vector.broadcast %c4_i32 : i32 to vector<6x128xi32>
    %111 = arith.cmpi eq, %11, %110 : vector<6x128xi32>
    %112 = vector.shape_cast %103 : vector<1x128xf32> to vector<1x128xf32>
    %113 = vector.broadcast %112 : vector<1x128xf32> to vector<6x128xf32>
    %114 = arith.select %111, %113, %92 : vector<6x128xi1>, vector<6x128xf32>
    %c4_i32_29 = arith.constant 4 : i32
    %115 = vector.broadcast %c4_i32_29 : i32 to vector<6x128xi32>
    %116 = arith.cmpi eq, %11, %115 : vector<6x128xi32>
    %117 = vector.shape_cast %109 : vector<1x128xi32> to vector<1x128xi32>
    %118 = vector.broadcast %117 : vector<1x128xi32> to vector<6x128xi32>
    %119 = arith.select %116, %118, %97 : vector<6x128xi1>, vector<6x128xi32>
    %120 = vector.broadcast %109 : vector<1x128xi32> to vector<64x128xi32>
    %121 = arith.cmpi eq, %10, %120 : vector<64x128xi32>
    %cst_30 = arith.constant -1.000000e+00 : f32
    %122 = vector.broadcast %cst_30 : f32 to vector<64x128xf32>
    %123 = arith.select %121, %122, %101 : vector<64x128xi1>, vector<64x128xf32>
    %cst_31 = arith.constant dense<0xFF800000> : vector<128xf32>
    %124 = vector.multi_reduction <maximumf>, %123, %cst_31 [0] : vector<64x128xf32> to vector<128xf32>
    %125 = vector.shape_cast %124 : vector<128xf32> to vector<1x128xf32>
    %126 = vector.broadcast %125 : vector<1x128xf32> to vector<64x128xf32>
    %127 = arith.cmpf oeq, %123, %126 : vector<64x128xf32>
    %c64_i32_32 = arith.constant 64 : i32
    %128 = vector.broadcast %c64_i32_32 : i32 to vector<64x128xi32>
    %129 = arith.select %127, %10, %128 : vector<64x128xi1>, vector<64x128xi32>
    %cst_33 = arith.constant dense<2147483647> : vector<128xi32>
    %130 = vector.multi_reduction <minsi>, %129, %cst_33 [0] : vector<64x128xi32> to vector<128xi32>
    %131 = vector.shape_cast %130 : vector<128xi32> to vector<1x128xi32>
    %c5_i32 = arith.constant 5 : i32
    %132 = vector.broadcast %c5_i32 : i32 to vector<6x128xi32>
    %133 = arith.cmpi eq, %11, %132 : vector<6x128xi32>
    %134 = vector.shape_cast %125 : vector<1x128xf32> to vector<1x128xf32>
    %135 = vector.broadcast %134 : vector<1x128xf32> to vector<6x128xf32>
    %136 = arith.select %133, %135, %114 : vector<6x128xi1>, vector<6x128xf32>
    %c5_i32_34 = arith.constant 5 : i32
    %137 = vector.broadcast %c5_i32_34 : i32 to vector<6x128xi32>
    %138 = arith.cmpi eq, %11, %137 : vector<6x128xi32>
    %139 = vector.shape_cast %131 : vector<1x128xi32> to vector<1x128xi32>
    %140 = vector.broadcast %139 : vector<1x128xi32> to vector<6x128xi32>
    %141 = arith.select %138, %140, %119 : vector<6x128xi1>, vector<6x128xi32>
    %142 = tpu.reciprocal %9 {approx = true} : vector<1x128xf32> -> vector<1x128xf32>
    %143 = arith.mulf %9, %142 : vector<1x128xf32>
    %cst_35 = arith.constant 2.000000e+00 : f32
    %144 = vector.broadcast %cst_35 : f32 to vector<1x128xf32>
    %145 = arith.subf %144, %143 : vector<1x128xf32>
    %146 = arith.mulf %142, %145 : vector<1x128xf32>
    %147 = vector.broadcast %146 : vector<1x128xf32> to vector<6x128xf32>
    %148 = arith.mulf %136, %147 : vector<6x128xf32>
    %149 = arith.truncf %148 : vector<6x128xf32> to vector<6x128xbf16>
    %c0_36 = arith.constant 0 : index
    %c0_37 = arith.constant 0 : index
    %150 = vector.load %arg3[%c0_36, %c0_37] : memref<6x128xbf16, #tpu.memory_space<vmem>>, vector<6x128xbf16>
    tpu.vector_store %arg3[%c0_36, %c0_37], %149 {strides = array<i32>} : memref<6x128xbf16, #tpu.memory_space<vmem>>, vector<6x128xbf16>,
    %c0_38 = arith.constant 0 : index
    %c0_39 = arith.constant 0 : index
    %151 = vector.load %arg4[%c0_38, %c0_39] : memref<6x128xi32, #tpu.memory_space<vmem>>, vector<6x128xi32>
    tpu.vector_store %arg4[%c0_38, %c0_39], %141 {strides = array<i32>} : memref<6x128xi32, #tpu.memory_space<vmem>>, vector<6x128xi32>,
    return
  }
  func.func @transform_0(%arg0: i32) -> (i32, i32) {
    %c0_i32 = arith.constant 0 : i32
    %c0_i32_0 = arith.constant 0 : i32
    return %arg0, %c0_i32 : i32, i32
  }
  func.func @transform_1(%arg0: i32) -> (i32, i32) {
    %c0_i32 = arith.constant 0 : i32
    %c0_i32_0 = arith.constant 0 : i32
    %c0_i32_1 = arith.constant 0 : i32
    return %c0_i32, %c0_i32_0 : i32, i32
  }
  func.func @transform_2(%arg0: i32) -> (i32, i32) {
    %c0_i32 = arith.constant 0 : i32
    %c0_i32_0 = arith.constant 0 : i32
    return %c0_i32, %arg0 : i32, i32
  }
  func.func @transform_3(%arg0: i32) -> (i32, i32) {
    %c0_i32 = arith.constant 0 : i32
    %c0_i32_0 = arith.constant 0 : i32
    return %c0_i32, %arg0 : i32, i32
  }
}

</mosaic_0001>

<llo_original>
// kernel: tpu_custom_call.1
$region0: #{tpu_custom_call.1}
  #allocation0 [shape = 'u32[]', space=smem, size = 0x4, offset = 0x4, fixed_abs, tag = 'smem constant byte address 0x4 - core index']
  #allocation1 [shape = 'u32[72,128]{1,0:T(1,128)}', space=vmem, size = 0x9000, scoped, tag = 'internal scratch']
  %s0 = inlined_call_operand.hbm [shape: bf16[128,128], index: 0, kind: input, shape index: {}]
  %s1 = inlined_call_operand.hbm [shape: bf16[64,128], index: 1, kind: input, shape index: {}]
  %s2 = inlined_call_operand.hbm [shape: bf16[6,128], index: 2, kind: output, shape index: {0}]
  %s3 = inlined_call_operand.hbm [shape: s32[6,128], index: 3, kind: output, shape index: {1}]
  %4 = xla_tuple %s2, %s3
  %s5 = sld [smem:[#allocation0]]
  $region34: #{tpu_custom_call.1} parent=0
    _
  %s7 = ssub.s32 1, %s5
  %s8 = scalar_select 0, %s7, %s5
  $region1: #{tpu_custom_call.1} parent=0
    #allocation2 [shape = 'u8[32768]{0}', space=vmem, size = 0x8000, scoped, tag = 'input window, operand 0, single buffered']
    #allocation3 [shape = 's32[1]{0}', space=sflag, size = 0x4, scoped, tag = 'scoped memory for tpu_custom_call.1']
    #allocation4 [shape = 's32[1]{0}', space=sflag, size = 0x4, scoped, tag = 'scoped memory for tpu_custom_call.1']
    #allocation5 [shape = 'u8[16384]{0}', space=vmem, size = 0x4000, scoped, tag = 'input window, operand 1, single buffered']
    #allocation6 [shape = 's32[1]{0}', space=sflag, size = 0x4, scoped, tag = 'scoped memory for tpu_custom_call.1']
    #allocation7 [shape = 'u8[2048]{0}', space=vmem, size = 0x800, scoped, tag = 'output window, operand 0, single buffered']
    #allocation8 [shape = 'u8[4096]{0}', space=vmem, size = 0x1000, scoped, tag = 'output window, operand 1, single buffered']
    #allocation9 [shape = 's32[1]{0}', space=sflag, size = 0x4, scoped, tag = 'scoped memory for tpu_custom_call.1']
    %9 = vsyncpa [#allocation3], 0
    %10 = vsyncpa [#allocation6], 0
    %11 = vsyncpa [#allocation4], 0
    %12 = vsyncpa [#allocation9], 0
    // Predicated region
    $region2: #{tpu_custom_call.1} parent=1 // pred_check
      _
    $region3: #{tpu_custom_call.1} parent=1 // pred_check_branch
      %14 = sbr.rel (0) target = $region5
    $region4: #{tpu_custom_call.1} parent=1 // pred_region
      %16 = vsyncadd [#allocation3], 0
      %s17 = sshll.u32 %s0, 4
      %s18 = int_to_ptr.hbm [resolvable:$true] %s17
      %s19 = sshll.u32 [#allocation2], 4
      %s20 = int_to_ptr.vmem [resolvable:$true] %s19
      %25 = dma.hbm_to_vmem [thread:$0]  %s18, 1024, %s20, [#allocation3], 64, 64, 4
    $region5: #{tpu_custom_call.1} parent=1 // pred_fallthru
      _
    // Predicated region
    $region6: #{tpu_custom_call.1} parent=1 // pred_check
      _
    $region7: #{tpu_custom_call.1} parent=1 // pred_check_branch
      %27 = sbr.rel (0) target = $region9
    $region8: #{tpu_custom_call.1} parent=1 // pred_region
      %29 = vsyncadd [#allocation6], 0
      %s30 = sshll.u32 %s1, 4
      %s31 = int_to_ptr.hbm [resolvable:$true] %s30
      %s32 = sshll.u32 [#allocation5], 4
      %s33 = int_to_ptr.vmem [resolvable:$true] %s32
      %38 = dma.hbm_to_vmem [thread:$0]  %s31, 512, %s33, [#allocation6], 64, 64, 4
    $region9: #{tpu_custom_call.1} parent=1 // pred_fallthru
      _
    // Predicated region
    $region10: #{tpu_custom_call.1} parent=1 // pred_check
      _
    $region11: #{tpu_custom_call.1} parent=1 // pred_check_branch
      %40 = sbr.rel (0) target = $region13
    $region12: #{tpu_custom_call.1} parent=1 // pred_region
      %42 = dma.done [#allocation3], 1024
    $region13: #{tpu_custom_call.1} parent=1 // pred_fallthru
      _
    // Predicated region
    $region14: #{tpu_custom_call.1} parent=1 // pred_check
      _
    $region15: #{tpu_custom_call.1} parent=1 // pred_check_branch
      %44 = sbr.rel (0) target = $region17
    $region16: #{tpu_custom_call.1} parent=1 // pred_region
      %46 = dma.done [#allocation6], 512
    $region17: #{tpu_custom_call.1} parent=1 // pred_fallthru
      _
    %v47 = vld [vmem:[#allocation5] sm:$0xf]
    %v48 = vld [vmem:[#allocation5 + $0x4] sm:$0xf]
    %v49 = vld [vmem:[#allocation5 + $0x8] sm:$0xf]
    %v50 = vld [vmem:[#allocation5 + $0xc] sm:$0xf]
    %v51 = vld [vmem:[#allocation5 + $0x10] sm:$0xf]
    %v52 = vld [vmem:[#allocation5 + $0x14] sm:$0xf]
    %v53 = vld [vmem:[#allocation5 + $0x18] sm:$0xf]
    %v54 = vld [vmem:[#allocation5 + $0x1c] sm:$0xf]
    %v55 = vld [vmem:[#allocation2] sm:$0xf]
    %v56 = vld [vmem:[#allocation2 + $0x4] sm:$0xf]
    %v57 = vld [vmem:[#allocation2 + $0x8] sm:$0xf]
    %v58 = vld [vmem:[#allocation2 + $0xc] sm:$0xf]
    %v59 = vld [vmem:[#allocation2 + $0x10] sm:$0xf]
    %v60 = vld [vmem:[#allocation2 + $0x14] sm:$0xf]
    %v61 = vld [vmem:[#allocation2 + $0x18] sm:$0xf]
    %v62 = vld [vmem:[#allocation2 + $0x1c] sm:$0xf]
    %v63 = vld [vmem:[#allocation2 + $0x20] sm:$0xf]
    %v64 = vld [vmem:[#allocation2 + $0x24] sm:$0xf]
    %v65 = vld [vmem:[#allocation2 + $0x28] sm:$0xf]
    %v66 = vld [vmem:[#allocation2 + $0x2c] sm:$0xf]
    %v67 = vld [vmem:[#allocation2 + $0x30] sm:$0xf]
    %v68 = vld [vmem:[#allocation2 + $0x34] sm:$0xf]
    %v69 = vld [vmem:[#allocation2 + $0x38] sm:$0xf]
    %v70 = vld [vmem:[#allocation2 + $0x3c] sm:$0xf]
    %v79 = vunpack.c.l.b16 %v47
    %v80 = vunpack.c.l.b16 %v48
    %v81 = vunpack.c.l.b16 %v49
    %v82 = vunpack.c.l.b16 %v50
    %v83 = vunpack.c.l.b16 %v51
    %v84 = vunpack.c.l.b16 %v52
    %v85 = vunpack.c.l.b16 %v53
    %v86 = vunpack.c.l.b16 %v54
    %v87 = vpack.c.b16 %v80, %v79
    %v88 = vpack.c.b16 %v82, %v81
    %v89 = vpack.c.b16 %v84, %v83
    %v90 = vpack.c.b16 %v86, %v85
    %v111 = vunpack.c.l.b16 %v55
    %v112 = vunpack.c.l.b16 %v56
    %v113 = vunpack.c.l.b16 %v57
    %v114 = vunpack.c.l.b16 %v58
    %v115 = vunpack.c.l.b16 %v59
    %v116 = vunpack.c.l.b16 %v60
    %v117 = vunpack.c.l.b16 %v61
    %v118 = vunpack.c.l.b16 %v62
    %v119 = vunpack.c.l.b16 %v63
    %v120 = vunpack.c.l.b16 %v64
    %v121 = vunpack.c.l.b16 %v65
    %v122 = vunpack.c.l.b16 %v66
    %v123 = vunpack.c.l.b16 %v67
    %v124 = vunpack.c.l.b16 %v68
    %v125 = vunpack.c.l.b16 %v69
    %v126 = vunpack.c.l.b16 %v70
    %v127 = vpack.c.b16 %v112, %v111
    %v128 = vpack.c.b16 %v114, %v113
    %v129 = vpack.c.b16 %v116, %v115
    %v130 = vpack.c.b16 %v118, %v117
    %v131 = vpack.c.b16 %v120, %v119
    %v132 = vpack.c.b16 %v122, %v121
    %v133 = vpack.c.b16 %v124, %v123
    %v134 = vpack.c.b16 %v126, %v125
    %143 = vmatpush.bf16.xpose.msra.mxu0 %v134
    %144 = vmatpush.bf16.xpose.msra.mxu0 %v133
    %145 = vmatpush.bf16.xpose.msra.mxu0 %v132
    %146 = vmatpush.bf16.xpose.msra.mxu0 %v131
    %147 = vmatpush.bf16.xpose.msra.mxu0 %v130
    %148 = vmatpush.bf16.xpose.msra.mxu0 %v129
    %149 = vmatpush.bf16.xpose.msra.mxu0 %v128
    %150 = vmatpush.bf16.xpose.msra.mxu0 %v127
    %151 = vmatmul.bf16.gmra.mxu0 %v87
    %v152 = vpop.f32.mrf.mxu0
    %v153 = vadd.f32 0.0, %v152
    %v154 = vpop.f32.mrf.mxu0
    %v155 = vadd.f32 0.0, %v154
    %156 = vmatmul.bf16.gmra.mxu0 %v88
    %v157 = vpop.f32.mrf.mxu0
    %v158 = vadd.f32 0.0, %v157
    %v159 = vpop.f32.mrf.mxu0
    %v160 = vadd.f32 0.0, %v159
    %161 = vmatmul.bf16.gmra.mxu0 %v89
    %v162 = vpop.f32.mrf.mxu0
    %v163 = vadd.f32 0.0, %v162
    %v164 = vpop.f32.mrf.mxu0
    %v165 = vadd.f32 0.0, %v164
    %166 = vmatmul.bf16.gmra.mxu0 %v90
    %v167 = vpop.f32.mrf.mxu0
    %v168 = vadd.f32 0.0, %v167
    %v169 = vpop.f32.mrf.mxu0
    %v170 = vadd.f32 0.0, %v169
    %171 = vdwg.mxu0
    %v172 = vmax.f32 %v153, %v163
    %v173 = vmax.f32 %v155, %v165
    %v174 = vmax.f32 %v158, %v168
    %v175 = vmax.f32 %v160, %v170
    %v176 = vmax.f32 %v172, %v173
    %v177 = vmax.f32 %v174, %v175
    %v178 = vmax.f32 %v176, %v177
    %v179 = vrot.slane %v178, 4
    %v180 = vmax.f32 %v178, %v179
    %v181 = vrot.slane %v180, 2
    %v182 = vmax.f32 %v180, %v181
    %v183 = vrot.slane %v182, 1
    %v184 = vmax.f32 %v182, %v183
    %v185 = vsub.f32 %v153, %v184
    %v186 = vsub.f32 %v155, %v184
    %v187 = vsub.f32 %v158, %v184
    %v188 = vsub.f32 %v160, %v184
    %v189 = vsub.f32 %v163, %v184
    %v190 = vsub.f32 %v165, %v184
    %v191 = vsub.f32 %v168, %v184
    %v192 = vsub.f32 %v170, %v184
    %v193 = vmul.f32 %v185, 1.442695
    %v194 = vpow.pop %v193
    %v195 = vmul.f32 %v186, 1.442695
    %v196 = vpow.pop %v195
    %v197 = vmul.f32 %v187, 1.442695
    %v198 = vpow.pop %v197
    %v199 = vmul.f32 %v188, 1.442695
    %v200 = vpow.pop %v199
    %v201 = vmul.f32 %v189, 1.442695
    %v202 = vpow.pop %v201
    %v203 = vmul.f32 %v190, 1.442695
    %v204 = vpow.pop %v203
    %v205 = vmul.f32 %v191, 1.442695
    %v206 = vpow.pop %v205
    %v207 = vmul.f32 %v192, 1.442695
    %v208 = vpow.pop %v207
    %v209 = vadd.f32 %v194, %v196
    %v210 = vadd.f32 %v209, %v198
    %v211 = vadd.f32 %v210, %v200
    %v212 = vadd.f32 %v211, %v202
    %v213 = vadd.f32 %v212, %v204
    %v214 = vadd.f32 %v213, %v206
    %v215 = vadd.f32 %v214, %v208
    %v216 = vrot.slane %v215, 4
    %v217 = vadd.f32 %v215, %v216
    %v218 = vrot.slane %v217, 2
    %v219 = vadd.f32 %v217, %v218
    %v220 = vrot.slane %v219, 1
    %v221 = vadd.f32 %v219, %v220
    %v222 = vlaneseq
    %v223 = vshrl.u32 %v222, 7
    %v224 = vadd.s32 %v223, 8
    %v225 = vadd.s32 %v223, 16
    %v226 = vadd.s32 %v223, 24
    %v227 = vadd.s32 %v223, 32
    %v228 = vadd.s32 %v223, 40
    %v229 = vadd.s32 %v223, 48
    %v230 = vadd.s32 %v223, 56
    %v231 = vmax.f32 %v194, %v202
    %v232 = vmax.f32 %v196, %v204
    %v233 = vmax.f32 %v198, %v206
    %v234 = vmax.f32 %v200, %v208
    %v235 = vmax.f32 %v231, %v232
    %v236 = vmax.f32 %v233, %v234
    %v237 = vmax.f32 %v235, %v236
    %v238 = vrot.slane %v237, 4
    %v239 = vmax.f32 %v237, %v238
    %v240 = vrot.slane %v239, 2
    %v241 = vmax.f32 %v239, %v240
    %v242 = vrot.slane %v241, 1
    %v243 = vmax.f32 %v241, %v242
    %vm244 = vcmp.eq.f32.partialorder %v194, %v243
    %vm245 = vcmp.eq.f32.partialorder %v196, %v243
    %vm246 = vcmp.eq.f32.partialorder %v198, %v243
    %vm247 = vcmp.eq.f32.partialorder %v200, %v243
    %vm248 = vcmp.eq.f32.partialorder %v202, %v243
    %vm249 = vcmp.eq.f32.partialorder %v204, %v243
    %vm250 = vcmp.eq.f32.partialorder %v206, %v243
    %vm251 = vcmp.eq.f32.partialorder %v208, %v243
    %v252 = vsel %vm244, %v223, 64
    %v253 = vsel %vm245, %v224, 64
    %v254 = vsel %vm246, %v225, 64
    %v255 = vsel %vm247, %v226, 64
    %v256 = vsel %vm248, %v227, 64
    %v257 = vsel %vm249, %v228, 64
    %v258 = vsel %vm250, %v229, 64
    %v259 = vsel %vm251, %v230, 64
    %vm260 = vcmp.lt.s32.totalorder %v252, %v256
    %v261 = vsel %vm260, %v252, %v256
    %vm262 = vcmp.lt.s32.totalorder %v253, %v257
    %v263 = vsel %vm262, %v253, %v257
    %vm264 = vcmp.lt.s32.totalorder %v254, %v258
    %v265 = vsel %vm264, %v254, %v258
    %vm266 = vcmp.lt.s32.totalorder %v255, %v259
    %v267 = vsel %vm266, %v255, %v259
    %vm268 = vcmp.lt.s32.totalorder %v261, %v263
    %v269 = vsel %vm268, %v261, %v263
    %vm270 = vcmp.lt.s32.totalorder %v265, %v267
    %v271 = vsel %vm270, %v265, %v267
    %vm272 = vcmp.lt.s32.totalorder %v269, %v271
    %v273 = vsel %vm272, %v269, %v271
    %v274 = vrot.slane %v273, 4
    %vm275 = vcmp.lt.s32.totalorder %v273, %v274
    %v276 = vsel %vm275, %v273, %v274
    %v277 = vrot.slane %v276, 2
    %vm278 = vcmp.lt.s32.totalorder %v276, %v277
    %v279 = vsel %vm278, %v276, %v277
    %v280 = vrot.slane %v279, 1
    %vm281 = vcmp.lt.s32.totalorder %v279, %v280
    %v282 = vsel %vm281, %v279, %v280
    %vm283 = vcmp.eq.s32.totalorder %v223, 0
    %v284 = vsel %vm283, %v243, 0.0
    %v285 = vsel %vm283, %v282, 0
    %vm286 = vcmp.eq.s32.totalorder %v223, %v282
    %vm287 = vcmp.eq.s32.totalorder %v224, %v282
    %vm288 = vcmp.eq.s32.totalorder %v225, %v282
    %vm289 = vcmp.eq.s32.totalorder %v226, %v282
    %vm290 = vcmp.eq.s32.totalorder %v227, %v282
    %vm291 = vcmp.eq.s32.totalorder %v228, %v282
    %vm292 = vcmp.eq.s32.totalorder %v229, %v282
    %vm293 = vcmp.eq.s32.totalorder %v230, %v282
    %v294 = vsel %vm286, -1.0, %v194
    %v295 = vsel %vm287, -1.0, %v196
    %v296 = vsel %vm288, -1.0, %v198
    %v297 = vsel %vm289, -1.0, %v200
    %v298 = vsel %vm290, -1.0, %v202
    %v299 = vsel %vm291, -1.0, %v204
    %v300 = vsel %vm292, -1.0, %v206
    %v301 = vsel %vm293, -1.0, %v208
    %v302 = vmax.f32 %v294, %v298
    %v303 = vmax.f32 %v295, %v299
    %v304 = vmax.f32 %v296, %v300
    %v305 = vmax.f32 %v297, %v301
    %v306 = vmax.f32 %v302, %v303
    %v307 = vmax.f32 %v304, %v305
    %v308 = vmax.f32 %v306, %v307
    %v309 = vrot.slane %v308, 4
    %v310 = vmax.f32 %v308, %v309
    %v311 = vrot.slane %v310, 2
    %v312 = vmax.f32 %v310, %v311
    %v313 = vrot.slane %v312, 1
    %v314 = vmax.f32 %v312, %v313
    %vm315 = vcmp.eq.f32.partialorder %v294, %v314
    %vm316 = vcmp.eq.f32.partialorder %v295, %v314
    %vm317 = vcmp.eq.f32.partialorder %v296, %v314
    %vm318 = vcmp.eq.f32.partialorder %v297, %v314
    %vm319 = vcmp.eq.f32.partialorder %v298, %v314
    %vm320 = vcmp.eq.f32.partialorder %v299, %v314
    %vm321 = vcmp.eq.f32.partialorder %v300, %v314
    %vm322 = vcmp.eq.f32.partialorder %v301, %v314
    %v323 = vsel %vm315, %v223, 64
    %v324 = vsel %vm316, %v224, 64
    %v325 = vsel %vm317, %v225, 64
    %v326 = vsel %vm318, %v226, 64
    %v327 = vsel %vm319, %v227, 64
    %v328 = vsel %vm320, %v228, 64
    %v329 = vsel %vm321, %v229, 64
    %v330 = vsel %vm322, %v230, 64
    %vm331 = vcmp.lt.s32.totalorder %v323, %v327
    %v332 = vsel %vm331, %v323, %v327
    %vm333 = vcmp.lt.s32.totalorder %v324, %v328
    %v334 = vsel %vm333, %v324, %v328
    %vm335 = vcmp.lt.s32.totalorder %v325, %v329
    %v336 = vsel %vm335, %v325, %v329
    %vm337 = vcmp.lt.s32.totalorder %v326, %v330
    %v338 = vsel %vm337, %v326, %v330
    %vm339 = vcmp.lt.s32.totalorder %v332, %v334
    %v340 = vsel %vm339, %v332, %v334
    %vm341 = vcmp.lt.s32.totalorder %v336, %v338
    %v342 = vsel %vm341, %v336, %v338
    %vm343 = vcmp.lt.s32.totalorder %v340, %v342
    %v344 = vsel %vm343, %v340, %v342
    %v345 = vrot.slane %v344, 4
    %vm346 = vcmp.lt.s32.totalorder %v344, %v345
    %v347 = vsel %vm346, %v344, %v345
    %v348 = vrot.slane %v347, 2
    %vm349 = vcmp.lt.s32.totalorder %v347, %v348
    %v350 = vsel %vm349, %v347, %v348
    %v351 = vrot.slane %v350, 1
    %vm352 = vcmp.lt.s32.totalorder %v350, %v351
    %v353 = vsel %vm352, %v350, %v351
    %vm354 = vcmp.eq.s32.totalorder %v223, 1
    %v355 = vsel %vm354, %v314, %v284
    %v356 = vsel %vm354, %v353, %v285
    %vm357 = vcmp.eq.s32.totalorder %v223, %v353
    %vm358 = vcmp.eq.s32.totalorder %v224, %v353
    %vm359 = vcmp.eq.s32.totalorder %v225, %v353
    %vm360 = vcmp.eq.s32.totalorder %v226, %v353
    %vm361 = vcmp.eq.s32.totalorder %v227, %v353
    %vm362 = vcmp.eq.s32.totalorder %v228, %v353
    %vm363 = vcmp.eq.s32.totalorder %v229, %v353
    %vm364 = vcmp.eq.s32.totalorder %v230, %v353
    %v365 = vsel %vm357, -1.0, %v294
    %v366 = vsel %vm358, -1.0, %v295
    %v367 = vsel %vm359, -1.0, %v296
    %v368 = vsel %vm360, -1.0, %v297
    %v369 = vsel %vm361, -1.0, %v298
    %v370 = vsel %vm362, -1.0, %v299
    %v371 = vsel %vm363, -1.0, %v300
    %v372 = vsel %vm364, -1.0, %v301
    %v373 = vmax.f32 %v365, %v369
    %v374 = vmax.f32 %v366, %v370
    %v375 = vmax.f32 %v367, %v371
    %v376 = vmax.f32 %v368, %v372
    %v377 = vmax.f32 %v373, %v374
    %v378 = vmax.f32 %v375, %v376
    %v379 = vmax.f32 %v377, %v378
    %v380 = vrot.slane %v379, 4
    %v381 = vmax.f32 %v379, %v380
    %v382 = vrot.slane %v381, 2
    %v383 = vmax.f32 %v381, %v382
    %v384 = vrot.slane %v383, 1
    %v385 = vmax.f32 %v383, %v384
    %vm386 = vcmp.eq.f32.partialorder %v365, %v385
    %vm387 = vcmp.eq.f32.partialorder %v366, %v385
    %vm388 = vcmp.eq.f32.partialorder %v367, %v385
    %vm389 = vcmp.eq.f32.partialorder %v368, %v385
    %vm390 = vcmp.eq.f32.partialorder %v369, %v385
    %vm391 = vcmp.eq.f32.partialorder %v370, %v385
    %vm392 = vcmp.eq.f32.partialorder %v371, %v385
    %vm393 = vcmp.eq.f32.partialorder %v372, %v385
    %v394 = vsel %vm386, %v223, 64
    %v395 = vsel %vm387, %v224, 64
    %v396 = vsel %vm388, %v225, 64
    %v397 = vsel %vm389, %v226, 64
    %v398 = vsel %vm390, %v227, 64
    %v399 = vsel %vm391, %v228, 64
    %v400 = vsel %vm392, %v229, 64
    %v401 = vsel %vm393, %v230, 64
    %vm402 = vcmp.lt.s32.totalorder %v394, %v398
    %v403 = vsel %vm402, %v394, %v398
    %vm404 = vcmp.lt.s32.totalorder %v395, %v399
    %v405 = vsel %vm404, %v395, %v399
    %vm406 = vcmp.lt.s32.totalorder %v396, %v400
    %v407 = vsel %vm406, %v396, %v400
    %vm408 = vcmp.lt.s32.totalorder %v397, %v401
    %v409 = vsel %vm408, %v397, %v401
    %vm410 = vcmp.lt.s32.totalorder %v403, %v405
    %v411 = vsel %vm410, %v403, %v405
    %vm412 = vcmp.lt.s32.totalorder %v407, %v409
    %v413 = vsel %vm412, %v407, %v409
    %vm414 = vcmp.lt.s32.totalorder %v411, %v413
    %v415 = vsel %vm414, %v411, %v413
    %v416 = vrot.slane %v415, 4
    %vm417 = vcmp.lt.s32.totalorder %v415, %v416
    %v418 = vsel %vm417, %v415, %v416
    %v419 = vrot.slane %v418, 2
    %vm420 = vcmp.lt.s32.totalorder %v418, %v419
    %v421 = vsel %vm420, %v418, %v419
    %v422 = vrot.slane %v421, 1
    %vm423 = vcmp.lt.s32.totalorder %v421, %v422
    %v424 = vsel %vm423, %v421, %v422
    %vm425 = vcmp.eq.s32.totalorder %v223, 2
    %v426 = vsel %vm425, %v385, %v355
    %v427 = vsel %vm425, %v424, %v356
    %vm428 = vcmp.eq.s32.totalorder %v223, %v424
    %vm429 = vcmp.eq.s32.totalorder %v224, %v424
    %vm430 = vcmp.eq.s32.totalorder %v225, %v424
    %vm431 = vcmp.eq.s32.totalorder %v226, %v424
    %vm432 = vcmp.eq.s32.totalorder %v227, %v424
    %vm433 = vcmp.eq.s32.totalorder %v228, %v424
    %vm434 = vcmp.eq.s32.totalorder %v229, %v424
    %vm435 = vcmp.eq.s32.totalorder %v230, %v424
    %v436 = vsel %vm428, -1.0, %v365
    %v437 = vsel %vm429, -1.0, %v366
    %v438 = vsel %vm430, -1.0, %v367
    %v439 = vsel %vm431, -1.0, %v368
    %v440 = vsel %vm432, -1.0, %v369
    %v441 = vsel %vm433, -1.0, %v370
    %v442 = vsel %vm434, -1.0, %v371
    %v443 = vsel %vm435, -1.0, %v372
    %v444 = vmax.f32 %v436, %v440
    %v445 = vmax.f32 %v437, %v441
    %v446 = vmax.f32 %v438, %v442
    %v447 = vmax.f32 %v439, %v443
    %v448 = vmax.f32 %v444, %v445
    %v449 = vmax.f32 %v446, %v447
    %v450 = vmax.f32 %v448, %v449
    %v451 = vrot.slane %v450, 4
    %v452 = vmax.f32 %v450, %v451
    %v453 = vrot.slane %v452, 2
    %v454 = vmax.f32 %v452, %v453
    %v455 = vrot.slane %v454, 1
    %v456 = vmax.f32 %v454, %v455
    %vm457 = vcmp.eq.f32.partialorder %v436, %v456
    %vm458 = vcmp.eq.f32.partialorder %v437, %v456
    %vm459 = vcmp.eq.f32.partialorder %v438, %v456
    %vm460 = vcmp.eq.f32.partialorder %v439, %v456
    %vm461 = vcmp.eq.f32.partialorder %v440, %v456
    %vm462 = vcmp.eq.f32.partialorder %v441, %v456
    %vm463 = vcmp.eq.f32.partialorder %v442, %v456
    %vm464 = vcmp.eq.f32.partialorder %v443, %v456
    %v465 = vsel %vm457, %v223, 64
    %v466 = vsel %vm458, %v224, 64
    %v467 = vsel %vm459, %v225, 64
    %v468 = vsel %vm460, %v226, 64
    %v469 = vsel %vm461, %v227, 64
    %v470 = vsel %vm462, %v228, 64
    %v471 = vsel %vm463, %v229, 64
    %v472 = vsel %vm464, %v230, 64
    %vm473 = vcmp.lt.s32.totalorder %v465, %v469
    %v474 = vsel %vm473, %v465, %v469
    %vm475 = vcmp.lt.s32.totalorder %v466, %v470
    %v476 = vsel %vm475, %v466, %v470
    %vm477 = vcmp.lt.s32.totalorder %v467, %v471
    %v478 = vsel %vm477, %v467, %v471
    %vm479 = vcmp.lt.s32.totalorder %v468, %v472
    %v480 = vsel %vm479, %v468, %v472
    %vm481 = vcmp.lt.s32.totalorder %v474, %v476
    %v482 = vsel %vm481, %v474, %v476
    %vm483 = vcmp.lt.s32.totalorder %v478, %v480
    %v484 = vsel %vm483, %v478, %v480
    %vm485 = vcmp.lt.s32.totalorder %v482, %v484
    %v486 = vsel %vm485, %v482, %v484
    %v487 = vrot.slane %v486, 4
    %vm488 = vcmp.lt.s32.totalorder %v486, %v487
    %v489 = vsel %vm488, %v486, %v487
    %v490 = vrot.slane %v489, 2
    %vm491 = vcmp.lt.s32.totalorder %v489, %v490
    %v492 = vsel %vm491, %v489, %v490
    %v493 = vrot.slane %v492, 1
    %vm494 = vcmp.lt.s32.totalorder %v492, %v493
    %v495 = vsel %vm494, %v492, %v493
    %vm496 = vcmp.eq.s32.totalorder %v223, 3
    %v497 = vsel %vm496, %v456, %v426
    %v498 = vsel %vm496, %v495, %v427
    %vm499 = vcmp.eq.s32.totalorder %v223, %v495
    %vm500 = vcmp.eq.s32.totalorder %v224, %v495
    %vm501 = vcmp.eq.s32.totalorder %v225, %v495
    %vm502 = vcmp.eq.s32.totalorder %v226, %v495
    %vm503 = vcmp.eq.s32.totalorder %v227, %v495
    %vm504 = vcmp.eq.s32.totalorder %v228, %v495
    %vm505 = vcmp.eq.s32.totalorder %v229, %v495
    %vm506 = vcmp.eq.s32.totalorder %v230, %v495
    %v507 = vsel %vm499, -1.0, %v436
    %v508 = vsel %vm500, -1.0, %v437
    %v509 = vsel %vm501, -1.0, %v438
    %v510 = vsel %vm502, -1.0, %v439
    %v511 = vsel %vm503, -1.0, %v440
    %v512 = vsel %vm504, -1.0, %v441
    %v513 = vsel %vm505, -1.0, %v442
    %v514 = vsel %vm506, -1.0, %v443
    %v515 = vmax.f32 %v507, %v511
    %v516 = vmax.f32 %v508, %v512
    %v517 = vmax.f32 %v509, %v513
    %v518 = vmax.f32 %v510, %v514
    %v519 = vmax.f32 %v515, %v516
    %v520 = vmax.f32 %v517, %v518
    %v521 = vmax.f32 %v519, %v520
    %v522 = vrot.slane %v521, 4
    %v523 = vmax.f32 %v521, %v522
    %v524 = vrot.slane %v523, 2
    %v525 = vmax.f32 %v523, %v524
    %v526 = vrot.slane %v525, 1
    %v527 = vmax.f32 %v525, %v526
    %vm528 = vcmp.eq.f32.partialorder %v507, %v527
    %vm529 = vcmp.eq.f32.partialorder %v508, %v527
    %vm530 = vcmp.eq.f32.partialorder %v509, %v527
    %vm531 = vcmp.eq.f32.partialorder %v510, %v527
    %vm532 = vcmp.eq.f32.partialorder %v511, %v527
    %vm533 = vcmp.eq.f32.partialorder %v512, %v527
    %vm534 = vcmp.eq.f32.partialorder %v513, %v527
    %vm535 = vcmp.eq.f32.partialorder %v514, %v527
    %v536 = vsel %vm528, %v223, 64
    %v537 = vsel %vm529, %v224, 64
    %v538 = vsel %vm530, %v225, 64
    %v539 = vsel %vm531, %v226, 64
    %v540 = vsel %vm532, %v227, 64
    %v541 = vsel %vm533, %v228, 64
    %v542 = vsel %vm534, %v229, 64
    %v543 = vsel %vm535, %v230, 64
    %vm544 = vcmp.lt.s32.totalorder %v536, %v540
    %v545 = vsel %vm544, %v536, %v540
    %vm546 = vcmp.lt.s32.totalorder %v537, %v541
    %v547 = vsel %vm546, %v537, %v541
    %vm548 = vcmp.lt.s32.totalorder %v538, %v542
    %v549 = vsel %vm548, %v538, %v542
    %vm550 = vcmp.lt.s32.totalorder %v539, %v543
    %v551 = vsel %vm550, %v539, %v543
    %vm552 = vcmp.lt.s32.totalorder %v545, %v547
    %v553 = vsel %vm552, %v545, %v547
    %vm554 = vcmp.lt.s32.totalorder %v549, %v551
    %v555 = vsel %vm554, %v549, %v551
    %vm556 = vcmp.lt.s32.totalorder %v553, %v555
    %v557 = vsel %vm556, %v553, %v555
    %v558 = vrot.slane %v557, 4
    %vm559 = vcmp.lt.s32.totalorder %v557, %v558
    %v560 = vsel %vm559, %v557, %v558
    %v561 = vrot.slane %v560, 2
    %vm562 = vcmp.lt.s32.totalorder %v560, %v561
    %v563 = vsel %vm562, %v560, %v561
    %v564 = vrot.slane %v563, 1
    %vm565 = vcmp.lt.s32.totalorder %v563, %v564
    %v566 = vsel %vm565, %v563, %v564
    %vm567 = vcmp.eq.s32.totalorder %v223, 4
    %v568 = vsel %vm567, %v527, %v497
    %v569 = vsel %vm567, %v566, %v498
    %vm570 = vcmp.eq.s32.totalorder %v223, %v566
    %vm571 = vcmp.eq.s32.totalorder %v224, %v566
    %vm572 = vcmp.eq.s32.totalorder %v225, %v566
    %vm573 = vcmp.eq.s32.totalorder %v226, %v566
    %vm574 = vcmp.eq.s32.totalorder %v227, %v566
    %vm575 = vcmp.eq.s32.totalorder %v228, %v566
    %vm576 = vcmp.eq.s32.totalorder %v229, %v566
    %vm577 = vcmp.eq.s32.totalorder %v230, %v566
    %v578 = vsel %vm570, -1.0, %v507
    %v579 = vsel %vm571, -1.0, %v508
    %v580 = vsel %vm572, -1.0, %v509
    %v581 = vsel %vm573, -1.0, %v510
    %v582 = vsel %vm574, -1.0, %v511
    %v583 = vsel %vm575, -1.0, %v512
    %v584 = vsel %vm576, -1.0, %v513
    %v585 = vsel %vm577, -1.0, %v514
    %v586 = vmax.f32 %v578, %v582
    %v587 = vmax.f32 %v579, %v583
    %v588 = vmax.f32 %v580, %v584
    %v589 = vmax.f32 %v581, %v585
    %v590 = vmax.f32 %v586, %v587
    %v591 = vmax.f32 %v588, %v589
    %v592 = vmax.f32 %v590, %v591
    %v593 = vrot.slane %v592, 4
    %v594 = vmax.f32 %v592, %v593
    %v595 = vrot.slane %v594, 2
    %v596 = vmax.f32 %v594, %v595
    %v597 = vrot.slane %v596, 1
    %v598 = vmax.f32 %v596, %v597
    %vm599 = vcmp.eq.f32.partialorder %v578, %v598
    %vm600 = vcmp.eq.f32.partialorder %v579, %v598
    %vm601 = vcmp.eq.f32.partialorder %v580, %v598
    %vm602 = vcmp.eq.f32.partialorder %v581, %v598
    %vm603 = vcmp.eq.f32.partialorder %v582, %v598
    %vm604 = vcmp.eq.f32.partialorder %v583, %v598
    %vm605 = vcmp.eq.f32.partialorder %v584, %v598
    %vm606 = vcmp.eq.f32.partialorder %v585, %v598
    %v607 = vsel %vm599, %v223, 64
    %v608 = vsel %vm600, %v224, 64
    %v609 = vsel %vm601, %v225, 64
    %v610 = vsel %vm602, %v226, 64
    %v611 = vsel %vm603, %v227, 64
    %v612 = vsel %vm604, %v228, 64
    %v613 = vsel %vm605, %v229, 64
    %v614 = vsel %vm606, %v230, 64
    %vm615 = vcmp.lt.s32.totalorder %v607, %v611
    %v616 = vsel %vm615, %v607, %v611
    %vm617 = vcmp.lt.s32.totalorder %v608, %v612
    %v618 = vsel %vm617, %v608, %v612
    %vm619 = vcmp.lt.s32.totalorder %v609, %v613
    %v620 = vsel %vm619, %v609, %v613
    %vm621 = vcmp.lt.s32.totalorder %v610, %v614
    %v622 = vsel %vm621, %v610, %v614
    %vm623 = vcmp.lt.s32.totalorder %v616, %v618
    %v624 = vsel %vm623, %v616, %v618
    %vm625 = vcmp.lt.s32.totalorder %v620, %v622
    %v626 = vsel %vm625, %v620, %v622
    %vm627 = vcmp.lt.s32.totalorder %v624, %v626
    %v628 = vsel %vm627, %v624, %v626
    %v629 = vrot.slane %v628, 4
    %vm630 = vcmp.lt.s32.totalorder %v628, %v629
    %v631 = vsel %vm630, %v628, %v629
    %v632 = vrot.slane %v631, 2
    %vm633 = vcmp.lt.s32.totalorder %v631, %v632
    %v634 = vsel %vm633, %v631, %v632
    %v635 = vrot.slane %v634, 1
    %vm636 = vcmp.lt.s32.totalorder %v634, %v635
    %v637 = vsel %vm636, %v634, %v635
    %vm638 = vcmp.eq.s32.totalorder %v223, 5
    %v639 = vsel %vm638, %v598, %v568
    %v640 = vsel %vm638, %v637, %v569
    %v641 = vrcp.pop %v221
    %v642 = vmul.f32 %v221, %v641
    %v643 = vsub.f32 2.0, %v642
    %v644 = vmul.f32 %v641, %v643
    %v645 = vmul.f32 %v639, %v644
    %v646 = vpack.c.bf16 %v645, %v645
    %647 = vst [vmem:[#allocation7] sm:$0x7] %v646
    %648 = vst [vmem:[#allocation8] sm:$0x3f] %v640
    // Predicated region
    $region18: #{tpu_custom_call.1} parent=1 // pred_check
      _
    $region19: #{tpu_custom_call.1} parent=1 // pred_check_branch
      %650 = sbr.rel (0) target = $region21
    $region20: #{tpu_custom_call.1} parent=1 // pred_region
      %652 = vsyncadd [#allocation4], 0
      %s654 = sshll.u32 [#allocation7], 4
      %s655 = int_to_ptr.vmem [resolvable:$true] %s654
      %s656 = sshll.u32 %s2, 4
      %s657 = int_to_ptr.hbm [resolvable:$true] %s656
      %659 = dma.vmem_to_hbm [thread:$0]  %s655, 64, %s657, [#allocation4]
    $region21: #{tpu_custom_call.1} parent=1 // pred_fallthru
      _
    // Predicated region
    $region22: #{tpu_custom_call.1} parent=1 // pred_check
      _
    $region23: #{tpu_custom_call.1} parent=1 // pred_check_branch
      %661 = sbr.rel (0) target = $region25
    $region24: #{tpu_custom_call.1} parent=1 // pred_region
      %663 = vsyncadd [#allocation9], 0
      %s665 = sshll.u32 [#allocation8], 4
      %s666 = int_to_ptr.vmem [resolvable:$true] %s665
      %s667 = sshll.u32 %s3, 4
      %s668 = int_to_ptr.hbm [resolvable:$true] %s667
      %670 = dma.vmem_to_hbm [thread:$0]  %s666, 128, %s668, [#allocation9]
    $region25: #{tpu_custom_call.1} parent=1 // pred_fallthru
      _
    // Predicated region
    $region26: #{tpu_custom_call.1} parent=1 // pred_check
      _
    $region27: #{tpu_custom_call.1} parent=1 // pred_check_branch
      %672 = sbr.rel (0) target = $region29
    $region28: #{tpu_custom_call.1} parent=1 // pred_region
      %674 = dma.done [#allocation4], 64
    $region29: #{tpu_custom_call.1} parent=1 // pred_fallthru
      _
    // Predicated region
    $region30: #{tpu_custom_call.1} parent=1 // pred_check
      _
    $region31: #{tpu_custom_call.1} parent=1 // pred_check_branch
      %676 = sbr.rel (0) target = $region33
    $region32: #{tpu_custom_call.1} parent=1 // pred_region
      %678 = dma.done [#allocation9], 128
    $region33: #{tpu_custom_call.1} parent=1 // pred_fallthru
      _
    %679 = vsyncpa [#allocation3], 1
    %680 = vsyncpa [#allocation6], 1
    %681 = vsyncpa [#allocation4], 1
    %682 = vsyncpa [#allocation9], 1

</llo_original>
